<compile_context>
chip_gen: v7x
topology: tpu7x:2x2x1
jax: 0.10.0
libtpu: 0.0.40
codegen_flags: <defaults>
</compile_context>

<pallas_src>
import jax
import jax.numpy as jnp
from jax.experimental import pallas as pl
from jax.experimental.pallas import tpu as pltpu

# ----------------------------- configuration --------------------------------
VOCAB = 100
SEQ   = 8
BATCH = 2
D_IN  = 32    # encoder hidden size == detector_input_size
H     = 16    # detector_hidden_size
C     = 8     # nb_classes == len(lang_list)
C_PAD = 128   # lane-dense padded class dim (unmasked full-lane stores)
B_PAD = 8     # f32 sublane tile (pad batch up to a full sublane tile)


# ------------------------------ Pallas kernel -------------------------------
def fused_head_kernel(pooled_ref, pool_w_ref, pool_b_ref,
                      w1_ref, b1_ref, w2sel_ref, b2_ref, out_ref):
    # Pooler (fused so `enc` never hits HBM):  enc = tanh(pooled @ Wp + bp)
    # tanh goes to the EUP slot -> essentially free next to the MXU pushes.
    enc = jnp.tanh(
        jnp.dot(pooled_ref[...], pool_w_ref[...],
                preferred_element_type=jnp.float32) + pool_b_ref[...])

    # Detector hidden layer:
    #   z = enc @ w1.view(D, H*C) + b1.view(1, H*C) ; a = relu(z)    (B, H*C)
    z = jnp.dot(enc, w1_ref[...],
                preferred_element_type=jnp.float32) + b1_ref[...]
    a = jnp.maximum(z, 0.0)          # ReLU epilogue kept in f32 (v5e-safe)

    # Output layer: logits[b, c] = sum_h a[b, h*C + c] * w2[h, c] + b2[c]
    # realized as one MXU matmul against the block-diagonal selector
    #   w2sel[h*C + c', c] = w2[h, c] if c' == c else 0
    # zero-padded to C_PAD=128 output lanes -> unmasked full-lane stores.
    out_ref[...] = (
        jnp.dot(a, w2sel_ref[...], preferred_element_type=jnp.float32)
        + b2_ref[...])


def lang_id_logits_fused(prep, pooled):
    """Fused pooler + detector head of LangIdentifier (hidden-layer variant)."""
    B, D = pooled.shape
    bp = max(B_PAD, ((B + 7) // 8) * 8)
    pooled_p = jnp.pad(pooled, ((0, bp - B), (0, 0)))   # pad batch to sublanes

    out = pl.pallas_call(
        fused_head_kernel,
        out_shape=jax.ShapeDtypeStruct((bp, C_PAD), jnp.float32),
        in_specs=[pl.BlockSpec(memory_space=pltpu.MemorySpace.VMEM)] * 7,
        out_specs=pl.BlockSpec(memory_space=pltpu.MemorySpace.VMEM),
    )(pooled_p,
      prep["pool_w"], prep["pool_b_row"],
      prep["w1flat"], prep["b1flat"],
      prep["w2sel_pad"], prep["b2_pad"])

    return out[:B, :C]   # drop batch padding + padded class lanes


# ---------------------- hoisted parameter preparation ------------------------
def prepare_inference_params(params):
    """One-time plumbing: flatten w1/b1 exactly like torch .view(D, -1),
    fold w2 into a zero-padded block-diagonal selector, pad b2.  Done once at
    init/param-load time so the per-call path has no extra XLA ops."""
    D, Hh, Cc = params["w1"].shape
    w1flat = params["w1"].reshape(D, Hh * Cc)                      # c fastest
    b1flat = params["b1"].reshape(1, Hh * Cc)
    w2sel = (params["w2"][:, :, None]
             * jnp.eye(Cc, dtype=jnp.float32)[None, :, :]).reshape(Hh * Cc, Cc)
    w2sel_pad = jnp.pad(w2sel, ((0, 0), (0, C_PAD - Cc)))
    b2_pad = jnp.pad(params["b2"].reshape(1, Cc), ((0, 0), (0, C_PAD - Cc)))
    return {
        "tok_emb": params["tok_emb"],
        "seg_emb": params["seg_emb"],
        "pool_w": params["pool_w"],
        "pool_b_row": params["pool_b"].reshape(1, -1),
        "w1flat": w1flat, "b1flat": b1flat,
        "w2sel_pad": w2sel_pad, "b2_pad": b2_pad,
    }


# ------------------------- synthetic encoder (glue) --------------------------
def embed_and_pool(prep, input_ids, input_mask, segment_ids):
    # TODO(synk): the injected BertForPretraining encoder is not reproduced;
    # this is a deterministic stand-in: token + segment embeddings and a
    # masked mean-pool (gathers stay in plain JAX); the dense pooler + tanh
    # run inside the Pallas kernel.
    emb = prep["tok_emb"][input_ids] + prep["seg_emb"][segment_ids]   # (B,S,D)
    m = input_mask[..., None].astype(jnp.float32)
    return (emb * m).sum(axis=1) / jnp.maximum(m.sum(axis=1), 1.0)    # (B,D)


@jax.jit
def lang_identifier_forward(prep, input_ids, input_mask, segment_ids,
                            candidate_classes=None):
    pooled = embed_and_pool(prep, input_ids, input_mask, segment_ids)
    logits = lang_id_logits_fused(prep, pooled)
    if candidate_classes is not None:
        # fancy-index gather (logits[rows, cols].view(B, nb_cands)) -- plain JAX
        logits = jnp.take_along_axis(logits, candidate_classes, axis=1)
    return logits


# ------------------------------ parameter init -------------------------------
def init_params(key):
    ks = jax.random.split(key, 6)

    def xavier(k, shape, fan_in, fan_out, gain):
        bound = gain * (6.0 / (fan_in + fan_out)) ** 0.5
        return jax.random.uniform(k, shape, jnp.float32, -bound, bound)

    relu_gain = 2.0 ** 0.5   # nn.init.calculate_gain('relu')
    sigm_gain = 1.0          # nn.init.calculate_gain('sigmoid')
    return {
        "tok_emb": jax.random.normal(ks[0], (VOCAB, D_IN), jnp.float32) * 0.02,
        "seg_emb": jax.random.normal(ks[1], (2, D_IN), jnp.float32) * 0.02,
        "pool_w":  xavier(ks[2], (D_IN, D_IN), D_IN, D_IN, 1.0),
        "pool_b":  jnp.zeros((D_IN,), jnp.float32),
        # detector head (torch xavier fan_in/out conventions for 3D / 2D)
        "w1": xavier(ks[3], (D_IN, H, C), H * C, D_IN * C, relu_gain),
        "b1": jnp.zeros((H, C), jnp.float32),
        "w2": xavier(ks[4], (H, C), C, H, sigm_gain),
        "b2": jnp.zeros((C,), jnp.float32),
    }


# ------------------------------ reference check ------------------------------
def ref_forward(params, pooled):
    enc = jnp.tanh(pooled @ params["pool_w"] + params["pool_b"])
    z = enc @ params["w1"].reshape(D_IN, -1)
    z = z.reshape(pooled.shape[0], H, C) + params["b1"]
    a = jnp.maximum(z, 0.0)
    return jnp.einsum("bhc,hc->bc", a, params["w2"]) + params["b2"]


# ------------------------------------ main -----------------------------------
if __name__ == "__main__":
    key = jax.random.PRNGKey(0)
    params = init_params(key)
    prep = prepare_inference_params(params)   # hoisted out of the call path

    k_ids, k_seg, k_cand = jax.random.split(jax.random.PRNGKey(1), 3)
    input_ids = jax.random.randint(k_ids, (BATCH, SEQ), 0, VOCAB, jnp.int32)
    input_mask = jnp.concatenate(
        [jnp.ones((BATCH, SEQ - 2), jnp.int32), jnp.zeros((BATCH, 2), jnp.int32)],
        axis=1)
    segment_ids = jax.random.randint(k_seg, (BATCH, SEQ), 0, 2, jnp.int32)

    # full logits path (fused pooler + detector head in one kernel)
    logits = lang_identifier_forward(prep, input_ids, input_mask, segment_ids)
    logits = jax.block_until_ready(logits)
    assert logits.shape == (BATCH, C)

    # candidate-class subsampling path (gather in plain JAX)
    cand = jax.random.randint(k_cand, (BATCH, 3), 0, C, jnp.int32)
    cand_logits = lang_identifier_forward(prep, input_ids, input_mask,
                                          segment_ids, candidate_classes=cand)
    cand_logits = jax.block_until_ready(cand_logits)
    assert cand_logits.shape == (BATCH, 3)

    # correctness vs. pure-JAX reference (pooler + detector head)
    pooled = embed_and_pool(prep, input_ids, input_mask, segment_ids)
    ref = ref_forward(params, pooled)
    assert jnp.allclose(logits, ref, atol=1e-5, rtol=1e-5)
    ref_cand = jnp.take_along_axis(ref, cand, axis=1)
    assert jnp.allclose(cand_logits, ref_cand, atol=1e-5, rtol=1e-5)

    print("KERNEL_OK")
</pallas_src>

<mosaic_0001>
module attributes {stable_mosaic.version = 11 : i64} {
  func.func @fused_head_kernel(%arg0: memref<8x32xf32, #tpu.memory_space<vmem>>, %arg1: memref<32x32xf32, #tpu.memory_space<vmem>>, %arg2: memref<1x32xf32, #tpu.memory_space<vmem>>, %arg3: memref<32x128xf32, #tpu.memory_space<vmem>>, %arg4: memref<1x128xf32, #tpu.memory_space<vmem>>, %arg5: memref<128x128xf32, #tpu.memory_space<vmem>>, %arg6: memref<1x128xf32, #tpu.memory_space<vmem>>, %arg7: memref<8x128xf32, #tpu.memory_space<vmem>>) attributes {dimension_semantics = [], scalar_prefetch = 0 : i64, scratch_operands = 0 : i64, tpu.core_type = #tpu.core_type<tc>} {
    %c0 = arith.constant 0 : index
    %c0_0 = arith.constant 0 : index
    %0 = vector.load %arg0[%c0, %c0_0] : memref<8x32xf32, #tpu.memory_space<vmem>>, vector<8x32xf32>
    %c0_1 = arith.constant 0 : index
    %c0_2 = arith.constant 0 : index
    %1 = vector.load %arg1[%c0_1, %c0_2] : memref<32x32xf32, #tpu.memory_space<vmem>>, vector<32x32xf32>
    %cst = arith.constant dense<0.000000e+00> : vector<8x32xf32>
    %2 = tpu.matmul %0, %1, %cst {dimension_numbers = #tpu.dot_dimension_numbers<[1], [0], [0], [1], [0, 0, 1, 1], [], []>} : vector<8x32xf32>, vector<32x32xf32>, vector<8x32xf32> -> vector<8x32xf32>
    %c0_3 = arith.constant 0 : index
    %c0_4 = arith.constant 0 : index
    %3 = vector.load %arg2[%c0_3, %c0_4] : memref<1x32xf32, #tpu.memory_space<vmem>>, vector<1x32xf32>
    %4 = vector.broadcast %3 : vector<1x32xf32> to vector<8x32xf32>
    %5 = arith.addf %2, %4 : vector<8x32xf32>
    %6 = math.tanh %5 : vector<8x32xf32>
    %c0_5 = arith.constant 0 : index
    %c0_6 = arith.constant 0 : index
    %7 = vector.load %arg3[%c0_5, %c0_6] : memref<32x128xf32, #tpu.memory_space<vmem>>, vector<32x128xf32>
    %cst_7 = arith.constant dense<0.000000e+00> : vector<8x128xf32>
    %8 = tpu.matmul %6, %7, %cst_7 {dimension_numbers = #tpu.dot_dimension_numbers<[1], [0], [0], [1], [0, 0, 1, 1], [], []>} : vector<8x32xf32>, vector<32x128xf32>, vector<8x128xf32> -> vector<8x128xf32>
    %c0_8 = arith.constant 0 : index
    %c0_9 = arith.constant 0 : index
    %9 = vector.load %arg4[%c0_8, %c0_9] : memref<1x128xf32, #tpu.memory_space<vmem>>, vector<1x128xf32>
    %10 = vector.broadcast %9 : vector<1x128xf32> to vector<8x128xf32>
    %11 = arith.addf %8, %10 : vector<8x128xf32>
    %cst_10 = arith.constant 0.000000e+00 : f32
    %12 = vector.broadcast %cst_10 : f32 to vector<8x128xf32>
    %13 = arith.maximumf %11, %12 : vector<8x128xf32>
    %c0_11 = arith.constant 0 : index
    %c0_12 = arith.constant 0 : index
    %14 = vector.load %arg5[%c0_11, %c0_12] : memref<128x128xf32, #tpu.memory_space<vmem>>, vector<128x128xf32>
    %cst_13 = arith.constant dense<0.000000e+00> : vector<8x128xf32>
    %15 = tpu.matmul %13, %14, %cst_13 {dimension_numbers = #tpu.dot_dimension_numbers<[1], [0], [0], [1], [0, 0, 1, 1], [], []>} : vector<8x128xf32>, vector<128x128xf32>, vector<8x128xf32> -> vector<8x128xf32>
    %c0_14 = arith.constant 0 : index
    %c0_15 = arith.constant 0 : index
    %16 = vector.load %arg6[%c0_14, %c0_15] : memref<1x128xf32, #tpu.memory_space<vmem>>, vector<1x128xf32>
    %17 = vector.broadcast %16 : vector<1x128xf32> to vector<8x128xf32>
    %18 = arith.addf %15, %17 : vector<8x128xf32>
    %c0_16 = arith.constant 0 : index
    %c0_17 = arith.constant 0 : index
    %19 = vector.load %arg7[%c0_16, %c0_17] : memref<8x128xf32, #tpu.memory_space<vmem>>, vector<8x128xf32>
    tpu.vector_store %arg7[%c0_16, %c0_17], %18 {strides = array<i32>} : memref<8x128xf32, #tpu.memory_space<vmem>>, vector<8x128xf32>,
    return
  }
}

</mosaic_0001>

<llo_original>
// kernel: lang_identifier_forward.1
$region0: #{lang_identifier_forward.1}
  #allocation0 [shape = 'u32[]', space=smem, size = 0x4, offset = 0x4, fixed_abs, tag = 'smem constant byte address 0x4 - core index']
  #allocation1 [shape = 'u32[144,128]{1,0:T(1,128)}', space=vmem, size = 0x12000, scoped, tag = 'internal scratch']
  %s0 = inlined_call_operand.vmem [shape: f32[8,32], index: 0, kind: input, shape index: {}]
  %s1 = inlined_call_operand.vmem [shape: f32[32,32], index: 1, kind: input, shape index: {}]
  %s2 = inlined_call_operand.vmem [shape: f32[1,32], index: 2, kind: input, shape index: {}]
  %s3 = inlined_call_operand.vmem [shape: f32[32,128], index: 3, kind: input, shape index: {}]
  %s4 = inlined_call_operand.vmem [shape: f32[1,128], index: 4, kind: input, shape index: {}]
  %s5 = inlined_call_operand.vmem [shape: f32[128,128], index: 5, kind: input, shape index: {}]
  %s6 = inlined_call_operand.vmem [shape: f32[1,128], index: 6, kind: input, shape index: {}]
  %s7 = inlined_call_operand.vmem [shape: f32[8,128], index: 7, kind: output, shape index: {}]
  %s8 = sld [smem:[#allocation0]]
  $region38: #{lang_identifier_forward.1} parent=0
    _
  %s10 = ssub.s32 1, %s8
  %s11 = scalar_select 0, %s10, %s8
  // Predicated region
  $region2: #{lang_identifier_forward.1} parent=0 // pred_check
    _
  $region3: #{lang_identifier_forward.1} parent=0 // pred_check_branch
    %13 = sbr.rel (0) target = $region5
  $region4: #{lang_identifier_forward.1} parent=0 // pred_region
    _
  $region5: #{lang_identifier_forward.1} parent=0 // pred_fallthru
    _
  // Predicated region
  $region6: #{lang_identifier_forward.1} parent=0 // pred_check
    _
  $region7: #{lang_identifier_forward.1} parent=0 // pred_check_branch
    %15 = sbr.rel (0) target = $region9
  $region8: #{lang_identifier_forward.1} parent=0 // pred_region
    _
  $region9: #{lang_identifier_forward.1} parent=0 // pred_fallthru
    _
  // Predicated region
  $region10: #{lang_identifier_forward.1} parent=0 // pred_check
    _
  $region11: #{lang_identifier_forward.1} parent=0 // pred_check_branch
    %17 = sbr.rel (0) target = $region13
  $region12: #{lang_identifier_forward.1} parent=0 // pred_region
    _
  $region13: #{lang_identifier_forward.1} parent=0 // pred_fallthru
    _
  // Predicated region
  $region14: #{lang_identifier_forward.1} parent=0 // pred_check
    _
  $region15: #{lang_identifier_forward.1} parent=0 // pred_check_branch
    %19 = sbr.rel (0) target = $region17
  $region16: #{lang_identifier_forward.1} parent=0 // pred_region
    _
  $region17: #{lang_identifier_forward.1} parent=0 // pred_fallthru
    _
  // Predicated region
  $region18: #{lang_identifier_forward.1} parent=0 // pred_check
    _
  $region19: #{lang_identifier_forward.1} parent=0 // pred_check_branch
    %21 = sbr.rel (0) target = $region21
  $region20: #{lang_identifier_forward.1} parent=0 // pred_region
    _
  $region21: #{lang_identifier_forward.1} parent=0 // pred_fallthru
    _
  // Predicated region
  $region22: #{lang_identifier_forward.1} parent=0 // pred_check
    _
  $region23: #{lang_identifier_forward.1} parent=0 // pred_check_branch
    %23 = sbr.rel (0) target = $region25
  $region24: #{lang_identifier_forward.1} parent=0 // pred_region
    _
  $region25: #{lang_identifier_forward.1} parent=0 // pred_fallthru
    _
  // Predicated region
  $region26: #{lang_identifier_forward.1} parent=0 // pred_check
    _
  $region27: #{lang_identifier_forward.1} parent=0 // pred_check_branch
    %25 = sbr.rel (0) target = $region29
  $region28: #{lang_identifier_forward.1} parent=0 // pred_region
    _
  $region29: #{lang_identifier_forward.1} parent=0 // pred_fallthru
    _
  %v26 = vld [vmem:[%s0] sm:$0xff]
  %v27 = vld [vmem:[%s1] sm:$0xff]
  %v28 = vld [vmem:[%s1 + $0x8] sm:$0xff]
  %v29 = vld [vmem:[%s1 + $0x10] sm:$0xff]
  %v30 = vld [vmem:[%s1 + $0x18] sm:$0xff]
  %v31 = vld [vmem:[%s2] sm:$0x1]
  %v33 = vlaneseq
  %v34 = vshrl.u32 %v33, 7
  %v35 = vsub.s32 0, %v34
  %v36 = vrot.slane %v31, %v35
  %vm38 = vcmask 261120
  %v40 = vsel %vm38, %v26, 0
  %42 = vmatprep.subr.mxu0 0.0
  %43 = vmatpush1.msra.mxu0 %v27
  %44 = vmatprep.subr.mxu0 0.0
  %45 = vmatpush1.msra.mxu0 %v28
  %46 = vmatprep.subr.mxu0 0.0
  %47 = vmatpush1.msra.mxu0 %v29
  %48 = vmatprep.subr.mxu0 0.0
  %49 = vmatpush1.msra.mxu0 %v30
  %50 = vmatprep.subr.mxu0 0.0
  %51 = vmatpush1.msra.mxu0 0.0
  %52 = vmatprep.subr.mxu0 0.0
  %53 = vmatpush1.msra.mxu0 0.0
  %54 = vmatprep.subr.mxu0 0.0
  %55 = vmatpush1.msra.mxu0 0.0
  %56 = vmatprep.subr.mxu0 0.0
  %57 = vmatpush1.msra.mxu0 0.0
  %58 = vmatprep.subr.mxu0 0.0
  %59 = vmatpush1.msra.mxu0 0.0
  %60 = vmatprep.subr.mxu0 0.0
  %61 = vmatpush1.msra.mxu0 0.0
  %62 = vmatprep.subr.mxu0 0.0
  %63 = vmatpush1.msra.mxu0 0.0
  %64 = vmatprep.subr.mxu0 0.0
  %65 = vmatpush1.msra.mxu0 0.0
  %66 = vmatprep.subr.mxu0 0.0
  %67 = vmatpush1.msra.mxu0 0.0
  %68 = vmatprep.subr.mxu0 0.0
  %69 = vmatpush1.msra.mxu0 0.0
  %70 = vmatprep.subr.mxu0 0.0
  %71 = vmatpush1.msra.mxu0 0.0
  %72 = vmatprep.subr.mxu0 0.0
  %73 = vmatpush1.msra.mxu0 0.0
  %74 = vmatprep.subr.mxu0 0.0
  %75 = vmatpush1.msra.mxu0 0.0
  %76 = vmatprep.subr.mxu0 0.0
  %77 = vmatpush1.msra.mxu0 0.0
  %78 = vmatprep.subr.mxu0 0.0
  %79 = vmatpush1.msra.mxu0 0.0
  %80 = vmatprep.subr.mxu0 0.0
  %81 = vmatpush1.msra.mxu0 0.0
  %82 = vmatprep.subr.mxu0 0.0
  %83 = vmatpush1.msra.mxu0 0.0
  %84 = vmatprep.subr.mxu0 0.0
  %85 = vmatpush1.msra.mxu0 0.0
  %86 = vmatprep.subr.mxu0 0.0
  %87 = vmatpush1.msra.mxu0 0.0
  %88 = vmatprep.subr.mxu0 0.0
  %89 = vmatpush1.msra.mxu0 0.0
  %90 = vmatprep.subr.mxu0 0.0
  %91 = vmatpush1.msra.mxu0 0.0
  %92 = vmatprep.subr.mxu0 0.0
  %93 = vmatpush1.msra.mxu0 0.0
  %94 = vmatprep.subr.mxu0 0.0
  %95 = vmatpush1.msra.mxu0 0.0
  %96 = vmatprep.subr.mxu0 0.0
  %97 = vmatpush1.msra.mxu0 0.0
  %98 = vmatprep.subr.mxu0 0.0
  %99 = vmatpush1.msra.mxu0 0.0
  %100 = vmatprep.subr.mxu0 0.0
  %101 = vmatpush1.msra.mxu0 0.0
  %102 = vmatprep.subr.mxu0 0.0
  %103 = vmatpush1.msra.mxu0 0.0
  %104 = vmatprep.subr.mxu0 0.0
  %105 = vmatpush1.msra.mxu0 0.0
  %106 = vmatprep.mubr.f32.mxu0 0.0
  %107 = vmatmul.mubr.f32.gmra.mrb[0].mxu0 %v40
  %v108 = vpop.f32.mrb[0].mxu0
  %v109 = vadd.f32 %v36, %v108
  %v110 = vpop.f32.mrb[0].mxu0
  %111 = vdwg.mxu0
  %v112 = vtanh.pop %v109
  %v113 = vld [vmem:[%s3] sm:$0xff]
  %v114 = vld [vmem:[%s3 + $0x8] sm:$0xff]
  %v115 = vld [vmem:[%s3 + $0x10] sm:$0xff]
  %v116 = vld [vmem:[%s3 + $0x18] sm:$0xff]
  %v117 = vld [vmem:[%s4] sm:$0x1]
  %v119 = vlaneseq
  %v120 = vshrl.u32 %v119, 7
  %v121 = vsub.s32 0, %v120
  %v122 = vrot.slane %v117, %v121
  %v125 = vsel %vm38, %v112, 0
  %127 = vmatprep.subr.mxu0 0.0
  %128 = vmatpush1.msra.mxu0 %v113
  %129 = vmatprep.subr.mxu0 0.0
  %130 = vmatpush1.msra.mxu0 %v114
  %131 = vmatprep.subr.mxu0 0.0
  %132 = vmatpush1.msra.mxu0 %v115
  %133 = vmatprep.subr.mxu0 0.0
  %134 = vmatpush1.msra.mxu0 %v116
  %135 = vmatprep.subr.mxu0 0.0
  %136 = vmatpush1.msra.mxu0 0.0
  %137 = vmatprep.subr.mxu0 0.0
  %138 = vmatpush1.msra.mxu0 0.0
  %139 = vmatprep.subr.mxu0 0.0
  %140 = vmatpush1.msra.mxu0 0.0
  %141 = vmatprep.subr.mxu0 0.0
  %142 = vmatpush1.msra.mxu0 0.0
  %143 = vmatprep.subr.mxu0 0.0
  %144 = vmatpush1.msra.mxu0 0.0
  %145 = vmatprep.subr.mxu0 0.0
  %146 = vmatpush1.msra.mxu0 0.0
  %147 = vmatprep.subr.mxu0 0.0
  %148 = vmatpush1.msra.mxu0 0.0
  %149 = vmatprep.subr.mxu0 0.0
  %150 = vmatpush1.msra.mxu0 0.0
  %151 = vmatprep.subr.mxu0 0.0
  %152 = vmatpush1.msra.mxu0 0.0
  %153 = vmatprep.subr.mxu0 0.0
  %154 = vmatpush1.msra.mxu0 0.0
  %155 = vmatprep.subr.mxu0 0.0
  %156 = vmatpush1.msra.mxu0 0.0
  %157 = vmatprep.subr.mxu0 0.0
  %158 = vmatpush1.msra.mxu0 0.0
  %159 = vmatprep.subr.mxu0 0.0
  %160 = vmatpush1.msra.mxu0 0.0
  %161 = vmatprep.subr.mxu0 0.0
  %162 = vmatpush1.msra.mxu0 0.0
  %163 = vmatprep.subr.mxu0 0.0
  %164 = vmatpush1.msra.mxu0 0.0
  %165 = vmatprep.subr.mxu0 0.0
  %166 = vmatpush1.msra.mxu0 0.0
  %167 = vmatprep.subr.mxu0 0.0
  %168 = vmatpush1.msra.mxu0 0.0
  %169 = vmatprep.subr.mxu0 0.0
  %170 = vmatpush1.msra.mxu0 0.0
  %171 = vmatprep.subr.mxu0 0.0
  %172 = vmatpush1.msra.mxu0 0.0
  %173 = vmatprep.subr.mxu0 0.0
  %174 = vmatpush1.msra.mxu0 0.0
  %175 = vmatprep.subr.mxu0 0.0
  %176 = vmatpush1.msra.mxu0 0.0
  %177 = vmatprep.subr.mxu0 0.0
  %178 = vmatpush1.msra.mxu0 0.0
  %179 = vmatprep.subr.mxu0 0.0
  %180 = vmatpush1.msra.mxu0 0.0
  %181 = vmatprep.subr.mxu0 0.0
  %182 = vmatpush1.msra.mxu0 0.0
  %183 = vmatprep.subr.mxu0 0.0
  %184 = vmatpush1.msra.mxu0 0.0
  %185 = vmatprep.subr.mxu0 0.0
  %186 = vmatpush1.msra.mxu0 0.0
  %187 = vmatprep.subr.mxu0 0.0
  %188 = vmatpush1.msra.mxu0 0.0
  %189 = vmatprep.subr.mxu0 0.0
  %190 = vmatpush1.msra.mxu0 0.0
  %191 = vmatprep.mubr.f32.mxu0 0.0
  %192 = vmatmul.mubr.f32.gmra.mrb[0].mxu0 %v125
  %v193 = vpop.f32.mrb[0].mxu0
  %v194 = vadd.f32 %v122, %v193
  %v195 = vpop.f32.mrb[0].mxu0
  %196 = vdwg.mxu0
  %v197 = vmax.f32 %v194, 0.0
  %v198 = vld [vmem:[%s5] sm:$0xff]
  %v199 = vld [vmem:[%s5 + $0x8] sm:$0xff]
  %v200 = vld [vmem:[%s5 + $0x10] sm:$0xff]
  %v201 = vld [vmem:[%s5 + $0x18] sm:$0xff]
  %v202 = vld [vmem:[%s5 + $0x20] sm:$0xff]
  %v203 = vld [vmem:[%s5 + $0x28] sm:$0xff]
  %v204 = vld [vmem:[%s5 + $0x30] sm:$0xff]
  %v205 = vld [vmem:[%s5 + $0x38] sm:$0xff]
  %v206 = vld [vmem:[%s5 + $0x40] sm:$0xff]
  %v207 = vld [vmem:[%s5 + $0x48] sm:$0xff]
  %v208 = vld [vmem:[%s5 + $0x50] sm:$0xff]
  %v209 = vld [vmem:[%s5 + $0x58] sm:$0xff]
  %v210 = vld [vmem:[%s5 + $0x60] sm:$0xff]
  %v211 = vld [vmem:[%s5 + $0x68] sm:$0xff]
  %v212 = vld [vmem:[%s5 + $0x70] sm:$0xff]
  %v213 = vld [vmem:[%s5 + $0x78] sm:$0xff]
  %v214 = vld [vmem:[%s6] sm:$0x1]
  %v216 = vlaneseq
  %v217 = vshrl.u32 %v216, 7
  %v218 = vsub.s32 0, %v217
  %v219 = vrot.slane %v214, %v218
  %221 = vmatprep.subr.mxu0 0.0
  %222 = vmatpush1.msra.mxu0 %v198
  %223 = vmatprep.subr.mxu0 0.0
  %224 = vmatpush1.msra.mxu0 %v199
  %225 = vmatprep.subr.mxu0 0.0
  %226 = vmatpush1.msra.mxu0 %v200
  %227 = vmatprep.subr.mxu0 0.0
  %228 = vmatpush1.msra.mxu0 %v201
  %229 = vmatprep.subr.mxu0 0.0
  %230 = vmatpush1.msra.mxu0 %v202
  %231 = vmatprep.subr.mxu0 0.0
  %232 = vmatpush1.msra.mxu0 %v203
  %233 = vmatprep.subr.mxu0 0.0
  %234 = vmatpush1.msra.mxu0 %v204
  %235 = vmatprep.subr.mxu0 0.0
  %236 = vmatpush1.msra.mxu0 %v205
  %237 = vmatprep.subr.mxu0 0.0
  %238 = vmatpush1.msra.mxu0 %v206
  %239 = vmatprep.subr.mxu0 0.0
  %240 = vmatpush1.msra.mxu0 %v207
  %241 = vmatprep.subr.mxu0 0.0
  %242 = vmatpush1.msra.mxu0 %v208
  %243 = vmatprep.subr.mxu0 0.0
  %244 = vmatpush1.msra.mxu0 %v209
  %245 = vmatprep.subr.mxu0 0.0
  %246 = vmatpush1.msra.mxu0 %v210
  %247 = vmatprep.subr.mxu0 0.0
  %248 = vmatpush1.msra.mxu0 %v211
  %249 = vmatprep.subr.mxu0 0.0
  %250 = vmatpush1.msra.mxu0 %v212
  %251 = vmatprep.subr.mxu0 0.0
  %252 = vmatpush1.msra.mxu0 %v213
  %253 = vmatprep.subr.mxu0 0.0
  %254 = vmatpush1.msra.mxu0 0.0
  %255 = vmatprep.subr.mxu0 0.0
  %256 = vmatpush1.msra.mxu0 0.0
  %257 = vmatprep.subr.mxu0 0.0
  %258 = vmatpush1.msra.mxu0 0.0
  %259 = vmatprep.subr.mxu0 0.0
  %260 = vmatpush1.msra.mxu0 0.0
  %261 = vmatprep.subr.mxu0 0.0
  %262 = vmatpush1.msra.mxu0 0.0
  %263 = vmatprep.subr.mxu0 0.0
  %264 = vmatpush1.msra.mxu0 0.0
  %265 = vmatprep.subr.mxu0 0.0
  %266 = vmatpush1.msra.mxu0 0.0
  %267 = vmatprep.subr.mxu0 0.0
  %268 = vmatpush1.msra.mxu0 0.0
  %269 = vmatprep.subr.mxu0 0.0
  %270 = vmatpush1.msra.mxu0 0.0
  %271 = vmatprep.subr.mxu0 0.0
  %272 = vmatpush1.msra.mxu0 0.0
  %273 = vmatprep.subr.mxu0 0.0
  %274 = vmatpush1.msra.mxu0 0.0
  %275 = vmatprep.subr.mxu0 0.0
  %276 = vmatpush1.msra.mxu0 0.0
  %277 = vmatprep.subr.mxu0 0.0
  %278 = vmatpush1.msra.mxu0 0.0
  %279 = vmatprep.subr.mxu0 0.0
  %280 = vmatpush1.msra.mxu0 0.0
  %281 = vmatprep.subr.mxu0 0.0
  %282 = vmatpush1.msra.mxu0 0.0
  %283 = vmatprep.subr.mxu0 0.0
  %284 = vmatpush1.msra.mxu0 0.0
  %285 = vmatprep.mubr.f32.mxu0 0.0
  %286 = vmatmul.mubr.f32.gmra.mrb[0].mxu0 %v197
  %v287 = vpop.f32.mrb[0].mxu0
  %v288 = vadd.f32 %v219, %v287
  %v289 = vpop.f32.mrb[0].mxu0
  %290 = vdwg.mxu0
  %291 = vst [vmem:[%s7] sm:$0xff] %v288
  // Predicated region
  $region30: #{lang_identifier_forward.1} parent=0 // pred_check
    _
  $region31: #{lang_identifier_forward.1} parent=0 // pred_check_branch
    %293 = sbr.rel (0) target = $region33
  $region32: #{lang_identifier_forward.1} parent=0 // pred_region
    _
  $region33: #{lang_identifier_forward.1} parent=0 // pred_fallthru
    _
  // Predicated region
  $region34: #{lang_identifier_forward.1} parent=0 // pred_check
    _
  $region35: #{lang_identifier_forward.1} parent=0 // pred_check_branch
    %295 = sbr.rel (0) target = $region37
  $region36: #{lang_identifier_forward.1} parent=0 // pred_region
    _
  $region37: #{lang_identifier_forward.1} parent=0 // pred_fallthru
    _

</llo_original>
